<compile_context>
chip_gen: v5e
topology: v5e:2x2
jax: 0.10.0
libtpu: 0.0.40
codegen_flags: <defaults>
</compile_context>

<pallas_src>
import jax
import jax.numpy as jnp
from jax.experimental import pallas as pl
from jax.experimental.pallas import tpu as pltpu

_MIB = 1024 * 1024


def _llama_ff_dim(hidden_size: int, multiple_of: int) -> int:
    ff_dim = int(2 * hidden_size * 4 / 3)
    return multiple_of * ((ff_dim + multiple_of - 1) // multiple_of)


def _round_up(x: int, m: int) -> int:
    return ((x + m - 1) // m) * m


def _vmem_capacity_bytes() -> int:
    """Physical per-core VMEM: 64 MiB on v7x, 128 MiB on v5e/v6e."""
    try:
        return int(pltpu.get_tpu_info().vmem_capacity_bytes)
    except Exception:
        pass
    try:
        kind = jax.devices()[0].device_kind.lower()
        if "v7" in kind:
            return 64 * _MIB
    except Exception:
        pass
    return 128 * _MIB


def _sublane_min(dtype) -> int:
    # sublane packing granularity: f32 -> 8, bf16 -> 16, int8/fp8 -> 32
    return {4: 8, 2: 16, 1: 32}.get(jnp.dtype(dtype).itemsize, 8)


def _vmem_estimate(tm: int, tf: int, H: int, act_bytes: int, w_bytes: int) -> int:
    x_buf = 2 * tm * H * act_bytes        # x tile, double-buffered
    o_buf = 2 * tm * H * act_bytes        # out tile, double-buffered
    w_buf = 2 * 3 * H * tf * w_bytes      # w1 + w3 + w2 slices, double-buffered
    acc = tm * H * 4                      # f32 accumulator scratch
    return x_buf + o_buf + w_buf + acc


def _mlp_kernel(x_ref, w1_ref, w3_ref, w2_ref, o_ref, acc_ref):
    # x_ref:  (tm, H)      token tile (block index constant over f -> no re-DMA)
    # w1_ref: (H, tf)      gate-projection slice
    # w3_ref: (H, tf)      up-projection slice
    # w2_ref: (tf, H)      down-projection slice
    # o_ref:  (tm, H)      output tile (written once, on the last f step)
    # acc_ref:(tm, H) f32  accumulator scratch
    f = pl.program_id(1)

    x = x_ref[...]
    # Gate / up matmuls with f32 MXU accumulation.
    h1 = jnp.dot(x, w1_ref[...], preferred_element_type=jnp.float32)
    h3 = jnp.dot(x, w3_ref[...], preferred_element_type=jnp.float32)
    # SiLU(h1) * h3 in f32 (sigmoid goes to the EUP; safe on v5e too).
    gated = (h1 * jax.nn.sigmoid(h1)) * h3
    down = jnp.dot(gated.astype(w2_ref.dtype), w2_ref[...],
                   preferred_element_type=jnp.float32)

    # First f-step: write straight into the accumulator (no zero-init pass).
    @pl.when(f == 0)
    def _():
        acc_ref[...] = down

    @pl.when(f > 0)
    def _():
        acc_ref[...] += down

    @pl.when(f == pl.num_programs(1) - 1)
    def _():
        o_ref[...] = acc_ref[...].astype(o_ref.dtype)


def llama_parallel_mlp(x, w1, w3, w2, *, tm: int | None = None, tf: int = 512):
    """SwiGLU MLP forward.

    x : [S, B, H]  activations ([seq, batch, hidden], GPT-NeoX layout)
    w1: [H, F] gate proj, w3: [H, F] up proj, w2: [F, H] down proj (bias-free)
    Returns (out [S, B, H], None) matching RowParallelLinear's skip_bias_add API.
    """
    S, B, H = x.shape
    F = w1.shape[1]
    T = S * B

    act_bytes = jnp.dtype(x.dtype).itemsize
    w_bytes = jnp.dtype(w1.dtype).itemsize

    # ---- generation-aware tile / VMEM-limit selection -----------------------
    vmem_cap = _vmem_capacity_bytes()
    if vmem_cap <= 64 * _MIB:
        # v7x-class: 64 MiB physical VMEM; leave headroom for compiler scratch.
        tm_default, vmem_limit = 512, 52 * _MIB
    else:
        # v5e / v6e: 128 MiB physical; big token tiles -> compute-bound f loop.
        tm_default, vmem_limit = 768, 100 * _MIB
    if tm is None:
        tm = tm_default

    sub = _sublane_min(x.dtype)
    tm_eff = max(sub, min(tm, _round_up(T, sub)))
    tm_eff = _round_up(tm_eff, sub)

    tf_eff = _round_up(min(tf, _round_up(F, 128)), 128)

    # Auto-shrink if the double-buffered working set would overflow the budget.
    while tm_eff > 2 * sub and _vmem_estimate(tm_eff, tf_eff, H, act_bytes, w_bytes) > vmem_limit:
        tm_eff = _round_up(tm_eff // 2, sub)
    while tf_eff > 128 and _vmem_estimate(tm_eff, tf_eff, H, act_bytes, w_bytes) > vmem_limit:
        tf_eff //= 2

    # ---- padding -------------------------------------------------------------
    T_pad = _round_up(T, tm_eff)
    F_pad = _round_up(F, tf_eff)          # pad F up instead of shrinking tf

    x2d = x.reshape(T, H)
    if T_pad != T:
        x2d = jnp.pad(x2d, ((0, T_pad - T), (0, 0)))   # zero rows -> zero outputs
    if F_pad != F:
        # Zero gate/up columns give gated == 0; padded w2 rows add nothing.
        # In production this would be materialized once at weight-load time.
        pad_f = F_pad - F
        w1 = jnp.pad(w1, ((0, 0), (0, pad_f)))
        w3 = jnp.pad(w3, ((0, 0), (0, pad_f)))
        w2 = jnp.pad(w2, ((0, pad_f), (0, 0)))

    n_tok = T_pad // tm_eff
    nf = F_pad // tf_eff

    cost = pl.CostEstimate(
        flops=6 * T_pad * H * F_pad,                   # 2*T*H*F each for w1, w3, w2
        transcendentals=T_pad * F_pad,                 # sigmoid
        bytes_accessed=(2 * T_pad * H * act_bytes      # x in + out
                        + n_tok * 3 * H * F_pad * w_bytes),
    )

    out2d = pl.pallas_call(
        _mlp_kernel,
        out_shape=jax.ShapeDtypeStruct((T_pad, H), x.dtype),
        grid_spec=pltpu.PrefetchScalarGridSpec(
            num_scalar_prefetch=0,
            grid=(n_tok, nf),                          # reduction (F) axis last
            in_specs=[
                pl.BlockSpec((tm_eff, H), lambda i, f: (i, 0)),   # x tile
                pl.BlockSpec((H, tf_eff), lambda i, f: (0, f)),   # w1 slice
                pl.BlockSpec((H, tf_eff), lambda i, f: (0, f)),   # w3 slice
                pl.BlockSpec((tf_eff, H), lambda i, f: (f, 0)),   # w2 slice
            ],
            out_specs=pl.BlockSpec((tm_eff, H), lambda i, f: (i, 0)),
            scratch_shapes=[pltpu.VMEM((tm_eff, H), jnp.float32)],
        ),
        compiler_params=pltpu.CompilerParams(
            dimension_semantics=("parallel", "arbitrary"),
            vmem_limit_bytes=vmem_limit,
        ),
        cost_estimate=cost,
    )(x2d, w1, w3, w2)

    out2d = out2d[:T]
    return out2d.reshape(S, B, H), None   # skip_bias_add with bias=False -> None


def _reference(x, w1, w3, w2):
    h1 = x @ w1
    h3 = x @ w3
    return (jax.nn.silu(h1) * h3) @ w2


if __name__ == "__main__":
    # Small shapes consistent with the module's forward.
    seq, batch, hidden = 8, 2, 128
    multiple_of = 256
    ff_dim = _llama_ff_dim(hidden, multiple_of)   # int(2*128*4/3)=341 -> 512

    key = jax.random.PRNGKey(0)
    kx, k1, k3, k2 = jax.random.split(key, 4)
    dtype = jnp.float32

    # Deterministic "init_method"-style weights (normal, std=0.02), stored [in, out].
    x = jax.random.normal(kx, (seq, batch, hidden), dtype=dtype)
    w1 = (0.02 * jax.random.normal(k1, (hidden, ff_dim))).astype(dtype)
    w3 = (0.02 * jax.random.normal(k3, (hidden, ff_dim))).astype(dtype)
    w2 = (0.02 * jax.random.normal(k2, (ff_dim, hidden))).astype(dtype)

    out, bias = llama_parallel_mlp(x, w1, w3, w2)
    out = jax.block_until_ready(out)

    ref = _reference(x, w1, w3, w2)
    assert out.shape == (seq, batch, hidden)
    assert bias is None
    assert jnp.allclose(out, ref, atol=1e-4, rtol=1e-4), "mismatch vs reference"

    print("KERNEL_OK")
</pallas_src>

<mosaic_0001>
module attributes {stable_mosaic.version = 11 : i64} {
  func.func @_mlp_kernel(%arg0: i32, %arg1: i32, %arg2: memref<16x128xf32, #tpu.memory_space<vmem>>, %arg3: memref<128x512xf32, #tpu.memory_space<vmem>>, %arg4: memref<128x512xf32, #tpu.memory_space<vmem>>, %arg5: memref<512x128xf32, #tpu.memory_space<vmem>>, %arg6: memref<16x128xf32, #tpu.memory_space<vmem>>, %arg7: memref<16x128xf32, #tpu.memory_space<vmem>>) attributes {dimension_semantics = [#tpu.dimension_semantics<parallel>, #tpu.dimension_semantics<arbitrary>], iteration_bounds = array<i64: 1, 1>, scalar_prefetch = 0 : i64, scratch_operands = 1 : i64, tpu.core_type = #tpu.core_type<tc>, window_params = [{transform_indices = @transform_0, window_bounds = array<i64: 16, 128>}, {transform_indices = @transform_1, window_bounds = array<i64: 128, 512>}, {transform_indices = @transform_2, window_bounds = array<i64: 128, 512>}, {transform_indices = @transform_3, window_bounds = array<i64: 512, 128>}, {transform_indices = @transform_4, window_bounds = array<i64: 16, 128>}]} {
    %c0 = arith.constant 0 : index
    %c0_0 = arith.constant 0 : index
    %0 = vector.load %arg2[%c0, %c0_0] : memref<16x128xf32, #tpu.memory_space<vmem>>, vector<16x128xf32>
    %c0_1 = arith.constant 0 : index
    %c0_2 = arith.constant 0 : index
    %1 = vector.load %arg3[%c0_1, %c0_2] : memref<128x512xf32, #tpu.memory_space<vmem>>, vector<128x512xf32>
    %cst = arith.constant dense<0.000000e+00> : vector<16x512xf32>
    %2 = tpu.matmul %0, %1, %cst {dimension_numbers = #tpu.dot_dimension_numbers<[1], [0], [0], [1], [0, 0, 1, 1], [], []>} : vector<16x128xf32>, vector<128x512xf32>, vector<16x512xf32> -> vector<16x512xf32>
    %c0_3 = arith.constant 0 : index
    %c0_4 = arith.constant 0 : index
    %3 = vector.load %arg4[%c0_3, %c0_4] : memref<128x512xf32, #tpu.memory_space<vmem>>, vector<128x512xf32>
    %cst_5 = arith.constant dense<0.000000e+00> : vector<16x512xf32>
    %4 = tpu.matmul %0, %3, %cst_5 {dimension_numbers = #tpu.dot_dimension_numbers<[1], [0], [0], [1], [0, 0, 1, 1], [], []>} : vector<16x128xf32>, vector<128x512xf32>, vector<16x512xf32> -> vector<16x512xf32>
    %5 = arith.negf %2 : vector<16x512xf32>
    %6 = math.exp %5 : vector<16x512xf32>
    %cst_6 = arith.constant 1.000000e+00 : f32
    %7 = vector.broadcast %cst_6 : f32 to vector<16x512xf32>
    %8 = arith.addf %7, %6 : vector<16x512xf32>
    %9 = arith.divf %7, %8 : vector<16x512xf32>
    %10 = arith.mulf %2, %9 : vector<16x512xf32>
    %11 = arith.mulf %10, %4 : vector<16x512xf32>
    %c0_7 = arith.constant 0 : index
    %c0_8 = arith.constant 0 : index
    %12 = vector.load %arg5[%c0_7, %c0_8] : memref<512x128xf32, #tpu.memory_space<vmem>>, vector<512x128xf32>
    %cst_9 = arith.constant dense<0.000000e+00> : vector<16x128xf32>
    %13 = tpu.matmul %11, %12, %cst_9 {dimension_numbers = #tpu.dot_dimension_numbers<[1], [0], [0], [1], [0, 0, 1, 1], [], []>} : vector<16x512xf32>, vector<512x128xf32>, vector<16x128xf32> -> vector<16x128xf32>
    %c0_i32 = arith.constant 0 : i32
    %14 = arith.cmpi eq, %arg1, %c0_i32 : i32
    %15 = arith.extui %14 : i1 to i32
    %c0_i32_10 = arith.constant 0 : i32
    %16 = arith.cmpi ne, %15, %c0_i32_10 : i32
    scf.if %16 {
      %c0_15 = arith.constant 0 : index
      %c0_16 = arith.constant 0 : index
      %23 = vector.load %arg7[%c0_15, %c0_16] : memref<16x128xf32, #tpu.memory_space<vmem>>, vector<16x128xf32>
      tpu.vector_store %arg7[%c0_15, %c0_16], %13 {strides = array<i32>} : memref<16x128xf32, #tpu.memory_space<vmem>>, vector<16x128xf32>,
    } else {
    }
    %c0_i32_11 = arith.constant 0 : i32
    %17 = arith.cmpi sgt, %arg1, %c0_i32_11 : i32
    %18 = arith.extui %17 : i1 to i32
    %c0_i32_12 = arith.constant 0 : i32
    %19 = arith.cmpi ne, %18, %c0_i32_12 : i32
    scf.if %19 {
      %c0_15 = arith.constant 0 : index
      %c0_16 = arith.constant 0 : index
      %23 = vector.load %arg7[%c0_15, %c0_16] : memref<16x128xf32, #tpu.memory_space<vmem>>, vector<16x128xf32>
      %24 = arith.addf %23, %13 : vector<16x128xf32>
      %c0_17 = arith.constant 0 : index
      %c0_18 = arith.constant 0 : index
      %25 = vector.load %arg7[%c0_17, %c0_18] : memref<16x128xf32, #tpu.memory_space<vmem>>, vector<16x128xf32>
      tpu.vector_store %arg7[%c0_17, %c0_18], %24 {strides = array<i32>} : memref<16x128xf32, #tpu.memory_space<vmem>>, vector<16x128xf32>,
    } else {
    }
    %c0_i32_13 = arith.constant 0 : i32
    %20 = arith.cmpi eq, %arg1, %c0_i32_13 : i32
    %21 = arith.extui %20 : i1 to i32
    %c0_i32_14 = arith.constant 0 : i32
    %22 = arith.cmpi ne, %21, %c0_i32_14 : i32
    scf.if %22 {
      %c0_15 = arith.constant 0 : index
      %c0_16 = arith.constant 0 : index
      %23 = vector.load %arg7[%c0_15, %c0_16] : memref<16x128xf32, #tpu.memory_space<vmem>>, vector<16x128xf32>
      %c0_17 = arith.constant 0 : index
      %c0_18 = arith.constant 0 : index
      %24 = vector.load %arg6[%c0_17, %c0_18] : memref<16x128xf32, #tpu.memory_space<vmem>>, vector<16x128xf32>
      tpu.vector_store %arg6[%c0_17, %c0_18], %23 {strides = array<i32>} : memref<16x128xf32, #tpu.memory_space<vmem>>, vector<16x128xf32>,
    } else {
    }
    return
  }
  func.func @transform_0(%arg0: i32, %arg1: i32) -> (i32, i32) {
    %c0_i32 = arith.constant 0 : i32
    %c0_i32_0 = arith.constant 0 : i32
    return %arg0, %c0_i32 : i32, i32
  }
  func.func @transform_1(%arg0: i32, %arg1: i32) -> (i32, i32) {
    %c0_i32 = arith.constant 0 : i32
    %c0_i32_0 = arith.constant 0 : i32
    return %c0_i32, %arg1 : i32, i32
  }
  func.func @transform_2(%arg0: i32, %arg1: i32) -> (i32, i32) {
    %c0_i32 = arith.constant 0 : i32
    %c0_i32_0 = arith.constant 0 : i32
    return %c0_i32, %arg1 : i32, i32
  }
  func.func @transform_3(%arg0: i32, %arg1: i32) -> (i32, i32) {
    %c0_i32 = arith.constant 0 : i32
    %c0_i32_0 = arith.constant 0 : i32
    return %arg1, %c0_i32 : i32, i32
  }
  func.func @transform_4(%arg0: i32, %arg1: i32) -> (i32, i32) {
    %c0_i32 = arith.constant 0 : i32
    %c0_i32_0 = arith.constant 0 : i32
    return %arg0, %c0_i32 : i32, i32
  }
}

</mosaic_0001>

<llo_original>
// kernel: tpu_custom_call.1
$region0: #{tpu_custom_call.1}
  #allocation0 [shape = 'u32[]', space=smem, size = 0x4, offset = 0x4, fixed_abs, tag = 'smem constant byte address 0x4 - core index']
  #allocation1 [shape = 'u32[72,128]{1,0:T(1,128)}', space=vmem, size = 0x9000, scoped, tag = 'internal scratch']
  #allocation2 [shape = 'f32[16,128]{1,0:T(8,128)}', space=vmem, size = 0x2000, scoped, tag = 'scratch operand']
  %s0 = inlined_call_operand.hbm [shape: f32[16,128], index: 0, kind: input, shape index: {}]
  %s1 = inlined_call_operand.hbm [shape: f32[128,512], index: 1, kind: input, shape index: {}]
  %s2 = inlined_call_operand.hbm [shape: f32[128,512], index: 2, kind: input, shape index: {}]
  %s3 = inlined_call_operand.hbm [shape: f32[512,128], index: 3, kind: input, shape index: {}]
  %s4 = inlined_call_operand.hbm [shape: f32[16,128], index: 4, kind: output, shape index: {}]
  %s5 = sld [smem:[#allocation0]]
  $region54: #{tpu_custom_call.1} parent=0
    _
  %s7 = ssub.s32 1, %s5
  %s8 = scalar_select 0, %s7, %s5
  $region1: #{tpu_custom_call.1} parent=0
    #allocation3 [shape = 'u8[8192]{0}', space=vmem, size = 0x2000, scoped, tag = 'input window, operand 0, single buffered']
    #allocation4 [shape = 's32[1]{0}', space=sflag, size = 0x4, scoped, tag = 'scoped memory for tpu_custom_call.1']
    #allocation5 [shape = 's32[1]{0}', space=sflag, size = 0x4, scoped, tag = 'scoped memory for tpu_custom_call.1']
    #allocation6 [shape = 'u8[262144]{0}', space=vmem, size = 0x40000, scoped, tag = 'input window, operand 1, single buffered']
    #allocation7 [shape = 's32[1]{0}', space=sflag, size = 0x4, scoped, tag = 'scoped memory for tpu_custom_call.1']
    #allocation8 [shape = 'u8[262144]{0}', space=vmem, size = 0x40000, scoped, tag = 'input window, operand 2, single buffered']
    #allocation9 [shape = 'u8[262144]{0}', space=vmem, size = 0x40000, scoped, tag = 'input window, operand 3, single buffered']
    #allocation10 [shape = 's32[1]{0}', space=sflag, size = 0x4, scoped, tag = 'scoped memory for tpu_custom_call.1']
    #allocation11 [shape = 'u8[8192]{0}', space=vmem, size = 0x2000, scoped, tag = 'output window, operand 0, single buffered']
    %9 = vsyncpa [#allocation4], 0
    %10 = vsyncpa [#allocation7], 0
    %11 = vsyncpa [#allocation10], 0
    %12 = vsyncpa [#allocation5], 0
    // Predicated region
    $region2: #{tpu_custom_call.1} parent=1 // pred_check
      _
    $region3: #{tpu_custom_call.1} parent=1 // pred_check_branch
      %14 = sbr.rel (0) target = $region5
    $region4: #{tpu_custom_call.1} parent=1 // pred_region
      %16 = vsyncadd [#allocation4], 0
      %s17 = sshll.u32 %s0, 4
      %s18 = int_to_ptr.hbm [resolvable:$true] %s17
      %s19 = sshll.u32 [#allocation3], 4
      %s20 = int_to_ptr.vmem [resolvable:$true] %s19
      %25 = dma.hbm_to_vmem [thread:$0]  %s18, 256, %s20, [#allocation4], 128, 128, 8
    $region5: #{tpu_custom_call.1} parent=1 // pred_fallthru
      _
    // Predicated region
    $region6: #{tpu_custom_call.1} parent=1 // pred_check
      _
    $region7: #{tpu_custom_call.1} parent=1 // pred_check_branch
      %27 = sbr.rel (0) target = $region9
    $region8: #{tpu_custom_call.1} parent=1 // pred_region
      %29 = vsyncadd [#allocation7], 0
      %s30 = sshll.u32 %s1, 4
      %s31 = int_to_ptr.hbm [resolvable:$true] %s30
      %s32 = sshll.u32 [#allocation6], 4
      %s33 = int_to_ptr.vmem [resolvable:$true] %s32
      %38 = dma.hbm_to_vmem [thread:$0]  %s31, 8192, %s33, [#allocation7], 512, 512, 32
    $region9: #{tpu_custom_call.1} parent=1 // pred_fallthru
      _
    // Predicated region
    $region10: #{tpu_custom_call.1} parent=1 // pred_check
      _
    $region11: #{tpu_custom_call.1} parent=1 // pred_check_branch
      %40 = sbr.rel (0) target = $region13
    $region12: #{tpu_custom_call.1} parent=1 // pred_region
      %42 = vsyncadd [#allocation7], 0
      %s43 = sshll.u32 %s2, 4
      %s44 = int_to_ptr.hbm [resolvable:$true] %s43
      %s45 = sshll.u32 [#allocation8], 4
      %s46 = int_to_ptr.vmem [resolvable:$true] %s45
      %51 = dma.hbm_to_vmem [thread:$0]  %s44, 8192, %s46, [#allocation7], 512, 512, 32
    $region13: #{tpu_custom_call.1} parent=1 // pred_fallthru
      _
    // Predicated region
    $region14: #{tpu_custom_call.1} parent=1 // pred_check
      _
    $region15: #{tpu_custom_call.1} parent=1 // pred_check_branch
      %53 = sbr.rel (0) target = $region17
    $region16: #{tpu_custom_call.1} parent=1 // pred_region
      %55 = vsyncadd [#allocation10], 0
      %s56 = sshll.u32 %s3, 4
      %s57 = int_to_ptr.hbm [resolvable:$true] %s56
      %s58 = sshll.u32 [#allocation9], 4
      %s59 = int_to_ptr.vmem [resolvable:$true] %s58
      %64 = dma.hbm_to_vmem [thread:$0]  %s57, 8192, %s59, [#allocation10], 128, 128, 8
    $region17: #{tpu_custom_call.1} parent=1 // pred_fallthru
      _
    // Predicated region
    $region18: #{tpu_custom_call.1} parent=1 // pred_check
      _
    $region19: #{tpu_custom_call.1} parent=1 // pred_check_branch
      %66 = sbr.rel (0) target = $region21
    $region20: #{tpu_custom_call.1} parent=1 // pred_region
      %68 = dma.done [#allocation4], 256
    $region21: #{tpu_custom_call.1} parent=1 // pred_fallthru
      _
    // Predicated region
    $region22: #{tpu_custom_call.1} parent=1 // pred_check
      _
    $region23: #{tpu_custom_call.1} parent=1 // pred_check_branch
      %70 = sbr.rel (0) target = $region25
    $region24: #{tpu_custom_call.1} parent=1 // pred_region
      %72 = dma.done [#allocation7], 8192
    $region25: #{tpu_custom_call.1} parent=1 // pred_fallthru
      _
    // Predicated region
    $region26: #{tpu_custom_call.1} parent=1 // pred_check
      _
    $region27: #{tpu_custom_call.1} parent=1 // pred_check_branch
      %74 = sbr.rel (0) target = $region29
    $region28: #{tpu_custom_call.1} parent=1 // pred_region
      %76 = dma.done [#allocation7], 8192
    $region29: #{tpu_custom_call.1} parent=1 // pred_fallthru
      _
    // Predicated region
    $region30: #{tpu_custom_call.1} parent=1 // pred_check
      _
    $region31: #{tpu_custom_call.1} parent=1 // pred_check_branch
      %78 = sbr.rel (0) target = $region33
    $region32: #{tpu_custom_call.1} parent=1 // pred_region
      %80 = dma.done [#allocation10], 8192
    $region33: #{tpu_custom_call.1} parent=1 // pred_fallthru
      _
    %v81 = vld [vmem:[#allocation3] sm:$0xff]
    %v82 = vld [vmem:[#allocation3 + $0x8] sm:$0xff]
    %v83 = vld [vmem:[#allocation6] sm:$0xff]
    %v84 = vld [vmem:[#allocation6 + $0x8] sm:$0xff]
    %v85 = vld [vmem:[#allocation6 + $0x10] sm:$0xff]
    %v86 = vld [vmem:[#allocation6 + $0x18] sm:$0xff]
    %v87 = vld [vmem:[#allocation6 + $0x20] sm:$0xff]
    %v88 = vld [vmem:[#allocation6 + $0x28] sm:$0xff]
    %v89 = vld [vmem:[#allocation6 + $0x30] sm:$0xff]
    %v90 = vld [vmem:[#allocation6 + $0x38] sm:$0xff]
    %v91 = vld [vmem:[#allocation6 + $0x40] sm:$0xff]
    %v92 = vld [vmem:[#allocation6 + $0x48] sm:$0xff]
    %v93 = vld [vmem:[#allocation6 + $0x50] sm:$0xff]
    %v94 = vld [vmem:[#allocation6 + $0x58] sm:$0xff]
    %v95 = vld [vmem:[#allocation6 + $0x60] sm:$0xff]
    %v96 = vld [vmem:[#allocation6 + $0x68] sm:$0xff]
    %v97 = vld [vmem:[#allocation6 + $0x70] sm:$0xff]
    %v98 = vld [vmem:[#allocation6 + $0x78] sm:$0xff]
    %v99 = vld [vmem:[#allocation6 + $0x80] sm:$0xff]
    %v100 = vld [vmem:[#allocation6 + $0x88] sm:$0xff]
    %v101 = vld [vmem:[#allocation6 + $0x90] sm:$0xff]
    %v102 = vld [vmem:[#allocation6 + $0x98] sm:$0xff]
    %v103 = vld [vmem:[#allocation6 + $0xa0] sm:$0xff]
    %v104 = vld [vmem:[#allocation6 + $0xa8] sm:$0xff]
    %v105 = vld [vmem:[#allocation6 + $0xb0] sm:$0xff]
    %v106 = vld [vmem:[#allocation6 + $0xb8] sm:$0xff]
    %v107 = vld [vmem:[#allocation6 + $0xc0] sm:$0xff]
    %v108 = vld [vmem:[#allocation6 + $0xc8] sm:$0xff]
    %v109 = vld [vmem:[#allocation6 + $0xd0] sm:$0xff]
    %v110 = vld [vmem:[#allocation6 + $0xd8] sm:$0xff]
    %v111 = vld [vmem:[#allocation6 + $0xe0] sm:$0xff]
    %v112 = vld [vmem:[#allocation6 + $0xe8] sm:$0xff]
    %v113 = vld [vmem:[#allocation6 + $0xf0] sm:$0xff]
    %v114 = vld [vmem:[#allocation6 + $0xf8] sm:$0xff]
    %v115 = vld [vmem:[#allocation6 + $0x100] sm:$0xff]
    %v116 = vld [vmem:[#allocation6 + $0x108] sm:$0xff]
    %v117 = vld [vmem:[#allocation6 + $0x110] sm:$0xff]
    %v118 = vld [vmem:[#allocation6 + $0x118] sm:$0xff]
    %v119 = vld [vmem:[#allocation6 + $0x120] sm:$0xff]
    %v120 = vld [vmem:[#allocation6 + $0x128] sm:$0xff]
    %v121 = vld [vmem:[#allocation6 + $0x130] sm:$0xff]
    %v122 = vld [vmem:[#allocation6 + $0x138] sm:$0xff]
    %v123 = vld [vmem:[#allocation6 + $0x140] sm:$0xff]
    %v124 = vld [vmem:[#allocation6 + $0x148] sm:$0xff]
    %v125 = vld [vmem:[#allocation6 + $0x150] sm:$0xff]
    %v126 = vld [vmem:[#allocation6 + $0x158] sm:$0xff]
    %v127 = vld [vmem:[#allocation6 + $0x160] sm:$0xff]
    %v128 = vld [vmem:[#allocation6 + $0x168] sm:$0xff]
    %v129 = vld [vmem:[#allocation6 + $0x170] sm:$0xff]
    %v130 = vld [vmem:[#allocation6 + $0x178] sm:$0xff]
    %v131 = vld [vmem:[#allocation6 + $0x180] sm:$0xff]
    %v132 = vld [vmem:[#allocation6 + $0x188] sm:$0xff]
    %v133 = vld [vmem:[#allocation6 + $0x190] sm:$0xff]
    %v134 = vld [vmem:[#allocation6 + $0x198] sm:$0xff]
    %v135 = vld [vmem:[#allocation6 + $0x1a0] sm:$0xff]
    %v136 = vld [vmem:[#allocation6 + $0x1a8] sm:$0xff]
    %v137 = vld [vmem:[#allocation6 + $0x1b0] sm:$0xff]
    %v138 = vld [vmem:[#allocation6 + $0x1b8] sm:$0xff]
    %v139 = vld [vmem:[#allocation6 + $0x1c0] sm:$0xff]
    %v140 = vld [vmem:[#allocation6 + $0x1c8] sm:$0xff]
    %v141 = vld [vmem:[#allocation6 + $0x1d0] sm:$0xff]
    %v142 = vld [vmem:[#allocation6 + $0x1d8] sm:$0xff]
    %v143 = vld [vmem:[#allocation6 + $0x1e0] sm:$0xff]
    %v144 = vld [vmem:[#allocation6 + $0x1e8] sm:$0xff]
    %v145 = vld [vmem:[#allocation6 + $0x1f0] sm:$0xff]
    %v146 = vld [vmem:[#allocation6 + $0x1f8] sm:$0xff]
    %147 = vmatpush.msra.mxu0 %v143
    %148 = vmatpush.msra.mxu0 %v139
    %149 = vmatpush.msra.mxu0 %v135
    %150 = vmatpush.msra.mxu0 %v131
    %151 = vmatpush.msra.mxu0 %v127
    %152 = vmatpush.msra.mxu0 %v123
    %153 = vmatpush.msra.mxu0 %v119
    %154 = vmatpush.msra.mxu0 %v115
    %155 = vmatpush.msra.mxu0 %v111
    %156 = vmatpush.msra.mxu0 %v107
    %157 = vmatpush.msra.mxu0 %v103
    %158 = vmatpush.msra.mxu0 %v99
    %159 = vmatpush.msra.mxu0 %v95
    %160 = vmatpush.msra.mxu0 %v91
    %161 = vmatpush.msra.mxu0 %v87
    %162 = vmatpush.msra.mxu0 %v83
    %163 = vmatmul.f32.gmra.mxu0 %v81
    %v164 = vpop.f32.mrf.mxu0
    %v165 = vadd.f32 0.0, %v164
    %166 = vmatmul.f32.gmra.mxu0 %v82
    %v167 = vpop.f32.mrf.mxu0
    %v168 = vadd.f32 0.0, %v167
    %169 = vdwg.mxu0
    %170 = vmatpush.msra.mxu0 %v144
    %171 = vmatpush.msra.mxu0 %v140
    %172 = vmatpush.msra.mxu0 %v136
    %173 = vmatpush.msra.mxu0 %v132
    %174 = vmatpush.msra.mxu0 %v128
    %175 = vmatpush.msra.mxu0 %v124
    %176 = vmatpush.msra.mxu0 %v120
    %177 = vmatpush.msra.mxu0 %v116
    %178 = vmatpush.msra.mxu0 %v112
    %179 = vmatpush.msra.mxu0 %v108
    %180 = vmatpush.msra.mxu0 %v104
    %181 = vmatpush.msra.mxu0 %v100
    %182 = vmatpush.msra.mxu0 %v96
    %183 = vmatpush.msra.mxu0 %v92
    %184 = vmatpush.msra.mxu0 %v88
    %185 = vmatpush.msra.mxu0 %v84
    %186 = vmatmul.f32.gmra.mxu0 %v81
    %v187 = vpop.f32.mrf.mxu0
    %v188 = vadd.f32 0.0, %v187
    %189 = vmatmul.f32.gmra.mxu0 %v82
    %v190 = vpop.f32.mrf.mxu0
    %v191 = vadd.f32 0.0, %v190
    %192 = vdwg.mxu0
    %193 = vmatpush.msra.mxu0 %v145
    %194 = vmatpush.msra.mxu0 %v141
    %195 = vmatpush.msra.mxu0 %v137
    %196 = vmatpush.msra.mxu0 %v133
    %197 = vmatpush.msra.mxu0 %v129
    %198 = vmatpush.msra.mxu0 %v125
    %199 = vmatpush.msra.mxu0 %v121
    %200 = vmatpush.msra.mxu0 %v117
    %201 = vmatpush.msra.mxu0 %v113
    %202 = vmatpush.msra.mxu0 %v109
    %203 = vmatpush.msra.mxu0 %v105
    %204 = vmatpush.msra.mxu0 %v101
    %205 = vmatpush.msra.mxu0 %v97
    %206 = vmatpush.msra.mxu0 %v93
    %207 = vmatpush.msra.mxu0 %v89
    %208 = vmatpush.msra.mxu0 %v85
    %209 = vmatmul.f32.gmra.mxu0 %v81
    %v210 = vpop.f32.mrf.mxu0
    %v211 = vadd.f32 0.0, %v210
    %212 = vmatmul.f32.gmra.mxu0 %v82
    %v213 = vpop.f32.mrf.mxu0
    %v214 = vadd.f32 0.0, %v213
    %215 = vdwg.mxu0
    %216 = vmatpush.msra.mxu0 %v146
    %217 = vmatpush.msra.mxu0 %v142
    %218 = vmatpush.msra.mxu0 %v138
    %219 = vmatpush.msra.mxu0 %v134
    %220 = vmatpush.msra.mxu0 %v130
    %221 = vmatpush.msra.mxu0 %v126
    %222 = vmatpush.msra.mxu0 %v122
    %223 = vmatpush.msra.mxu0 %v118
    %224 = vmatpush.msra.mxu0 %v114
    %225 = vmatpush.msra.mxu0 %v110
    %226 = vmatpush.msra.mxu0 %v106
    %227 = vmatpush.msra.mxu0 %v102
    %228 = vmatpush.msra.mxu0 %v98
    %229 = vmatpush.msra.mxu0 %v94
    %230 = vmatpush.msra.mxu0 %v90
    %231 = vmatpush.msra.mxu0 %v86
    %232 = vmatmul.f32.gmra.mxu0 %v81
    %v233 = vpop.f32.mrf.mxu0
    %v234 = vadd.f32 0.0, %v233
    %235 = vmatmul.f32.gmra.mxu0 %v82
    %v236 = vpop.f32.mrf.mxu0
    %v237 = vadd.f32 0.0, %v236
    %238 = vdwg.mxu0
    %v239 = vld [vmem:[#allocation8] sm:$0xff]
    %v240 = vld [vmem:[#allocation8 + $0x8] sm:$0xff]
    %v241 = vld [vmem:[#allocation8 + $0x10] sm:$0xff]
    %v242 = vld [vmem:[#allocation8 + $0x18] sm:$0xff]
    %v243 = vld [vmem:[#allocation8 + $0x20] sm:$0xff]
    %v244 = vld [vmem:[#allocation8 + $0x28] sm:$0xff]
    %v245 = vld [vmem:[#allocation8 + $0x30] sm:$0xff]
    %v246 = vld [vmem:[#allocation8 + $0x38] sm:$0xff]
    %v247 = vld [vmem:[#allocation8 + $0x40] sm:$0xff]
    %v248 = vld [vmem:[#allocation8 + $0x48] sm:$0xff]
    %v249 = vld [vmem:[#allocation8 + $0x50] sm:$0xff]
    %v250 = vld [vmem:[#allocation8 + $0x58] sm:$0xff]
    %v251 = vld [vmem:[#allocation8 + $0x60] sm:$0xff]
    %v252 = vld [vmem:[#allocation8 + $0x68] sm:$0xff]
    %v253 = vld [vmem:[#allocation8 + $0x70] sm:$0xff]
    %v254 = vld [vmem:[#allocation8 + $0x78] sm:$0xff]
    %v255 = vld [vmem:[#allocation8 + $0x80] sm:$0xff]
    %v256 = vld [vmem:[#allocation8 + $0x88] sm:$0xff]
    %v257 = vld [vmem:[#allocation8 + $0x90] sm:$0xff]
    %v258 = vld [vmem:[#allocation8 + $0x98] sm:$0xff]
    %v259 = vld [vmem:[#allocation8 + $0xa0] sm:$0xff]
    %v260 = vld [vmem:[#allocation8 + $0xa8] sm:$0xff]
    %v261 = vld [vmem:[#allocation8 + $0xb0] sm:$0xff]
    %v262 = vld [vmem:[#allocation8 + $0xb8] sm:$0xff]
    %v263 = vld [vmem:[#allocation8 + $0xc0] sm:$0xff]
    %v264 = vld [vmem:[#allocation8 + $0xc8] sm:$0xff]
    %v265 = vld [vmem:[#allocation8 + $0xd0] sm:$0xff]
    %v266 = vld [vmem:[#allocation8 + $0xd8] sm:$0xff]
    %v267 = vld [vmem:[#allocation8 + $0xe0] sm:$0xff]
    %v268 = vld [vmem:[#allocation8 + $0xe8] sm:$0xff]
    %v269 = vld [vmem:[#allocation8 + $0xf0] sm:$0xff]
    %v270 = vld [vmem:[#allocation8 + $0xf8] sm:$0xff]
    %v271 = vld [vmem:[#allocation8 + $0x100] sm:$0xff]
    %v272 = vld [vmem:[#allocation8 + $0x108] sm:$0xff]
    %v273 = vld [vmem:[#allocation8 + $0x110] sm:$0xff]
    %v274 = vld [vmem:[#allocation8 + $0x118] sm:$0xff]
    %v275 = vld [vmem:[#allocation8 + $0x120] sm:$0xff]
    %v276 = vld [vmem:[#allocation8 + $0x128] sm:$0xff]
    %v277 = vld [vmem:[#allocation8 + $0x130] sm:$0xff]
    %v278 = vld [vmem:[#allocation8 + $0x138] sm:$0xff]
    %v279 = vld [vmem:[#allocation8 + $0x140] sm:$0xff]
    %v280 = vld [vmem:[#allocation8 + $0x148] sm:$0xff]
    %v281 = vld [vmem:[#allocation8 + $0x150] sm:$0xff]
    %v282 = vld [vmem:[#allocation8 + $0x158] sm:$0xff]
    %v283 = vld [vmem:[#allocation8 + $0x160] sm:$0xff]
    %v284 = vld [vmem:[#allocation8 + $0x168] sm:$0xff]
    %v285 = vld [vmem:[#allocation8 + $0x170] sm:$0xff]
    %v286 = vld [vmem:[#allocation8 + $0x178] sm:$0xff]
    %v287 = vld [vmem:[#allocation8 + $0x180] sm:$0xff]
    %v288 = vld [vmem:[#allocation8 + $0x188] sm:$0xff]
    %v289 = vld [vmem:[#allocation8 + $0x190] sm:$0xff]
    %v290 = vld [vmem:[#allocation8 + $0x198] sm:$0xff]
    %v291 = vld [vmem:[#allocation8 + $0x1a0] sm:$0xff]
    %v292 = vld [vmem:[#allocation8 + $0x1a8] sm:$0xff]
    %v293 = vld [vmem:[#allocation8 + $0x1b0] sm:$0xff]
    %v294 = vld [vmem:[#allocation8 + $0x1b8] sm:$0xff]
    %v295 = vld [vmem:[#allocation8 + $0x1c0] sm:$0xff]
    %v296 = vld [vmem:[#allocation8 + $0x1c8] sm:$0xff]
    %v297 = vld [vmem:[#allocation8 + $0x1d0] sm:$0xff]
    %v298 = vld [vmem:[#allocation8 + $0x1d8] sm:$0xff]
    %v299 = vld [vmem:[#allocation8 + $0x1e0] sm:$0xff]
    %v300 = vld [vmem:[#allocation8 + $0x1e8] sm:$0xff]
    %v301 = vld [vmem:[#allocation8 + $0x1f0] sm:$0xff]
    %v302 = vld [vmem:[#allocation8 + $0x1f8] sm:$0xff]
    %303 = vmatpush.msra.mxu0 %v299
    %304 = vmatpush.msra.mxu0 %v295
    %305 = vmatpush.msra.mxu0 %v291
    %306 = vmatpush.msra.mxu0 %v287
    %307 = vmatpush.msra.mxu0 %v283
    %308 = vmatpush.msra.mxu0 %v279
    %309 = vmatpush.msra.mxu0 %v275
    %310 = vmatpush.msra.mxu0 %v271
    %311 = vmatpush.msra.mxu0 %v267
    %312 = vmatpush.msra.mxu0 %v263
    %313 = vmatpush.msra.mxu0 %v259
    %314 = vmatpush.msra.mxu0 %v255
    %315 = vmatpush.msra.mxu0 %v251
    %316 = vmatpush.msra.mxu0 %v247
    %317 = vmatpush.msra.mxu0 %v243
    %318 = vmatpush.msra.mxu0 %v239
    %319 = vmatmul.f32.gmra.mxu0 %v81
    %v320 = vpop.f32.mrf.mxu0
    %v321 = vadd.f32 0.0, %v320
    %322 = vmatmul.f32.gmra.mxu0 %v82
    %v323 = vpop.f32.mrf.mxu0
    %v324 = vadd.f32 0.0, %v323
    %325 = vdwg.mxu0
    %326 = vmatpush.msra.mxu0 %v300
    %327 = vmatpush.msra.mxu0 %v296
    %328 = vmatpush.msra.mxu0 %v292
    %329 = vmatpush.msra.mxu0 %v288
    %330 = vmatpush.msra.mxu0 %v284
    %331 = vmatpush.msra.mxu0 %v280
    %332 = vmatpush.msra.mxu0 %v276
    %333 = vmatpush.msra.mxu0 %v272
    %334 = vmatpush.msra.mxu0 %v268
    %335 = vmatpush.msra.mxu0 %v264
    %336 = vmatpush.msra.mxu0 %v260
    %337 = vmatpush.msra.mxu0 %v256
    %338 = vmatpush.msra.mxu0 %v252
    %339 = vmatpush.msra.mxu0 %v248
    %340 = vmatpush.msra.mxu0 %v244
    %341 = vmatpush.msra.mxu0 %v240
    %342 = vmatmul.f32.gmra.mxu0 %v81
    %v343 = vpop.f32.mrf.mxu0
    %v344 = vadd.f32 0.0, %v343
    %345 = vmatmul.f32.gmra.mxu0 %v82
    %v346 = vpop.f32.mrf.mxu0
    %v347 = vadd.f32 0.0, %v346
    %348 = vdwg.mxu0
    %349 = vmatpush.msra.mxu0 %v301
    %350 = vmatpush.msra.mxu0 %v297
    %351 = vmatpush.msra.mxu0 %v293
    %352 = vmatpush.msra.mxu0 %v289
    %353 = vmatpush.msra.mxu0 %v285
    %354 = vmatpush.msra.mxu0 %v281
    %355 = vmatpush.msra.mxu0 %v277
    %356 = vmatpush.msra.mxu0 %v273
    %357 = vmatpush.msra.mxu0 %v269
    %358 = vmatpush.msra.mxu0 %v265
    %359 = vmatpush.msra.mxu0 %v261
    %360 = vmatpush.msra.mxu0 %v257
    %361 = vmatpush.msra.mxu0 %v253
    %362 = vmatpush.msra.mxu0 %v249
    %363 = vmatpush.msra.mxu0 %v245
    %364 = vmatpush.msra.mxu0 %v241
    %365 = vmatmul.f32.gmra.mxu0 %v81
    %v366 = vpop.f32.mrf.mxu0
    %v367 = vadd.f32 0.0, %v366
    %368 = vmatmul.f32.gmra.mxu0 %v82
    %v369 = vpop.f32.mrf.mxu0
    %v370 = vadd.f32 0.0, %v369
    %371 = vdwg.mxu0
    %372 = vmatpush.msra.mxu0 %v302
    %373 = vmatpush.msra.mxu0 %v298
    %374 = vmatpush.msra.mxu0 %v294
    %375 = vmatpush.msra.mxu0 %v290
    %376 = vmatpush.msra.mxu0 %v286
    %377 = vmatpush.msra.mxu0 %v282
    %378 = vmatpush.msra.mxu0 %v278
    %379 = vmatpush.msra.mxu0 %v274
    %380 = vmatpush.msra.mxu0 %v270
    %381 = vmatpush.msra.mxu0 %v266
    %382 = vmatpush.msra.mxu0 %v262
    %383 = vmatpush.msra.mxu0 %v258
    %384 = vmatpush.msra.mxu0 %v254
    %385 = vmatpush.msra.mxu0 %v250
    %386 = vmatpush.msra.mxu0 %v246
    %387 = vmatpush.msra.mxu0 %v242
    %388 = vmatmul.f32.gmra.mxu0 %v81
    %v389 = vpop.f32.mrf.mxu0
    %v390 = vadd.f32 0.0, %v389
    %391 = vmatmul.f32.gmra.mxu0 %v82
    %v392 = vpop.f32.mrf.mxu0
    %v393 = vadd.f32 0.0, %v392
    %394 = vdwg.mxu0
    %v395 = vxor.u32 %v165, 2147483648
    %v396 = vxor.u32 %v188, 2147483648
    %v397 = vxor.u32 %v211, 2147483648
    %v398 = vxor.u32 %v234, 2147483648
    %v399 = vxor.u32 %v168, 2147483648
    %v400 = vxor.u32 %v191, 2147483648
    %v401 = vxor.u32 %v214, 2147483648
    %v402 = vxor.u32 %v237, 2147483648
    %v403 = vmul.f32 %v395, 1.442695
    %v404 = vpow.pop %v403
    %v405 = vmul.f32 %v396, 1.442695
    %v406 = vpow.pop %v405
    %v407 = vmul.f32 %v397, 1.442695
    %v408 = vpow.pop %v407
    %v409 = vmul.f32 %v398, 1.442695
    %v410 = vpow.pop %v409
    %v411 = vmul.f32 %v399, 1.442695
    %v412 = vpow.pop %v411
    %v413 = vmul.f32 %v400, 1.442695
    %v414 = vpow.pop %v413
    %v415 = vmul.f32 %v401, 1.442695
    %v416 = vpow.pop %v415
    %v417 = vmul.f32 %v402, 1.442695
    %v418 = vpow.pop %v417
    %v419 = vadd.f32 %v404, 1.0
    %v420 = vadd.f32 %v406, 1.0
    %v421 = vadd.f32 %v408, 1.0
    %v422 = vadd.f32 %v410, 1.0
    %v423 = vadd.f32 %v412, 1.0
    %v424 = vadd.f32 %v414, 1.0
    %v425 = vadd.f32 %v416, 1.0
    %v426 = vadd.f32 %v418, 1.0
    %v427 = vrcp.pop %v419
    %v428 = vmul.f32 %v419, %v427
    %v429 = vsub.f32 1.0, %v428
    %v430 = vmul.f32 %v427, %v429
    %v431 = vadd.f32 %v427, %v430
    %vm432 = vweird.f32 %v419
    %vm433 = vweird.f32 %v427
    %vm434 = vmor %vm432, %vm433
    %v435 = vsel %vm434, %v427, %v431
    %v436 = vand.u32 2147483647, %v419
    %vm437 = vcmp.eq.f32.partialorder %v436, 8.507059e+37
    %v438 = vand.u32 %v419, 2147483648
    %v439 = vor.u32 1.1754944e-38, %v438
    %v440 = vsel %vm437, %v439, %v435
    %v441 = vmul.f32 1.0, %v440
    %v442 = vrcp.pop %v420
    %v443 = vmul.f32 %v420, %v442
    %v444 = vsub.f32 1.0, %v443
    %v445 = vmul.f32 %v442, %v444
    %v446 = vadd.f32 %v442, %v445
    %vm447 = vweird.f32 %v420
    %vm448 = vweird.f32 %v442
    %vm449 = vmor %vm447, %vm448
    %v450 = vsel %vm449, %v442, %v446
    %v451 = vand.u32 2147483647, %v420
    %vm452 = vcmp.eq.f32.partialorder %v451, 8.507059e+37
    %v453 = vand.u32 %v420, 2147483648
    %v454 = vor.u32 1.1754944e-38, %v453
    %v455 = vsel %vm452, %v454, %v450
    %v456 = vmul.f32 1.0, %v455
    %v457 = vrcp.pop %v421
    %v458 = vmul.f32 %v421, %v457
    %v459 = vsub.f32 1.0, %v458
    %v460 = vmul.f32 %v457, %v459
    %v461 = vadd.f32 %v457, %v460
    %vm462 = vweird.f32 %v421
    %vm463 = vweird.f32 %v457
    %vm464 = vmor %vm462, %vm463
    %v465 = vsel %vm464, %v457, %v461
    %v466 = vand.u32 2147483647, %v421
    %vm467 = vcmp.eq.f32.partialorder %v466, 8.507059e+37
    %v468 = vand.u32 %v421, 2147483648
    %v469 = vor.u32 1.1754944e-38, %v468
    %v470 = vsel %vm467, %v469, %v465
    %v471 = vmul.f32 1.0, %v470
    %v472 = vrcp.pop %v422
    %v473 = vmul.f32 %v422, %v472
    %v474 = vsub.f32 1.0, %v473
    %v475 = vmul.f32 %v472, %v474
    %v476 = vadd.f32 %v472, %v475
    %vm477 = vweird.f32 %v422
    %vm478 = vweird.f32 %v472
    %vm479 = vmor %vm477, %vm478
    %v480 = vsel %vm479, %v472, %v476
    %v481 = vand.u32 2147483647, %v422
    %vm482 = vcmp.eq.f32.partialorder %v481, 8.507059e+37
    %v483 = vand.u32 %v422, 2147483648
    %v484 = vor.u32 1.1754944e-38, %v483
    %v485 = vsel %vm482, %v484, %v480
    %v486 = vmul.f32 1.0, %v485
    %v487 = vrcp.pop %v423
    %v488 = vmul.f32 %v423, %v487
    %v489 = vsub.f32 1.0, %v488
    %v490 = vmul.f32 %v487, %v489
    %v491 = vadd.f32 %v487, %v490
    %vm492 = vweird.f32 %v423
    %vm493 = vweird.f32 %v487
    %vm494 = vmor %vm492, %vm493
    %v495 = vsel %vm494, %v487, %v491
    %v496 = vand.u32 2147483647, %v423
    %vm497 = vcmp.eq.f32.partialorder %v496, 8.507059e+37
    %v498 = vand.u32 %v423, 2147483648
    %v499 = vor.u32 1.1754944e-38, %v498
    %v500 = vsel %vm497, %v499, %v495
    %v501 = vmul.f32 1.0, %v500
    %v502 = vrcp.pop %v424
    %v503 = vmul.f32 %v424, %v502
    %v504 = vsub.f32 1.0, %v503
    %v505 = vmul.f32 %v502, %v504
    %v506 = vadd.f32 %v502, %v505
    %vm507 = vweird.f32 %v424
    %vm508 = vweird.f32 %v502
    %vm509 = vmor %vm507, %vm508
    %v510 = vsel %vm509, %v502, %v506
    %v511 = vand.u32 2147483647, %v424
    %vm512 = vcmp.eq.f32.partialorder %v511, 8.507059e+37
    %v513 = vand.u32 %v424, 2147483648
    %v514 = vor.u32 1.1754944e-38, %v513
    %v515 = vsel %vm512, %v514, %v510
    %v516 = vmul.f32 1.0, %v515
    %v517 = vrcp.pop %v425
    %v518 = vmul.f32 %v425, %v517
    %v519 = vsub.f32 1.0, %v518
    %v520 = vmul.f32 %v517, %v519
    %v521 = vadd.f32 %v517, %v520
    %vm522 = vweird.f32 %v425
    %vm523 = vweird.f32 %v517
    %vm524 = vmor %vm522, %vm523
    %v525 = vsel %vm524, %v517, %v521
    %v526 = vand.u32 2147483647, %v425
    %vm527 = vcmp.eq.f32.partialorder %v526, 8.507059e+37
    %v528 = vand.u32 %v425, 2147483648
    %v529 = vor.u32 1.1754944e-38, %v528
    %v530 = vsel %vm527, %v529, %v525
    %v531 = vmul.f32 1.0, %v530
    %v532 = vrcp.pop %v426
    %v533 = vmul.f32 %v426, %v532
    %v534 = vsub.f32 1.0, %v533
    %v535 = vmul.f32 %v532, %v534
    %v536 = vadd.f32 %v532, %v535
    %vm537 = vweird.f32 %v426
    %vm538 = vweird.f32 %v532
    %vm539 = vmor %vm537, %vm538
    %v540 = vsel %vm539, %v532, %v536
    %v541 = vand.u32 2147483647, %v426
    %vm542 = vcmp.eq.f32.partialorder %v541, 8.507059e+37
    %v543 = vand.u32 %v426, 2147483648
    %v544 = vor.u32 1.1754944e-38, %v543
    %v545 = vsel %vm542, %v544, %v540
    %v546 = vmul.f32 1.0, %v545
    %v547 = vmul.f32 %v165, %v441
    %v548 = vmul.f32 %v188, %v456
    %v549 = vmul.f32 %v211, %v471
    %v550 = vmul.f32 %v234, %v486
    %v551 = vmul.f32 %v168, %v501
    %v552 = vmul.f32 %v191, %v516
    %v553 = vmul.f32 %v214, %v531
    %v554 = vmul.f32 %v237, %v546
    %v555 = vmul.f32 %v547, %v321
    %v556 = vmul.f32 %v548, %v344
    %v557 = vmul.f32 %v549, %v367
    %v558 = vmul.f32 %v550, %v390
    %v559 = vmul.f32 %v551, %v324
    %v560 = vmul.f32 %v552, %v347
    %v561 = vmul.f32 %v553, %v370
    %v562 = vmul.f32 %v554, %v393
    %v563 = vld [vmem:[#allocation9] sm:$0xff]
    %v564 = vld [vmem:[#allocation9 + $0x8] sm:$0xff]
    %v565 = vld [vmem:[#allocation9 + $0x10] sm:$0xff]
    %v566 = vld [vmem:[#allocation9 + $0x18] sm:$0xff]
    %v567 = vld [vmem:[#allocation9 + $0x20] sm:$0xff]
    %v568 = vld [vmem:[#allocation9 + $0x28] sm:$0xff]
    %v569 = vld [vmem:[#allocation9 + $0x30] sm:$0xff]
    %v570 = vld [vmem:[#allocation9 + $0x38] sm:$0xff]
    %v571 = vld [vmem:[#allocation9 + $0x40] sm:$0xff]
    %v572 = vld [vmem:[#allocation9 + $0x48] sm:$0xff]
    %v573 = vld [vmem:[#allocation9 + $0x50] sm:$0xff]
    %v574 = vld [vmem:[#allocation9 + $0x58] sm:$0xff]
    %v575 = vld [vmem:[#allocation9 + $0x60] sm:$0xff]
    %v576 = vld [vmem:[#allocation9 + $0x68] sm:$0xff]
    %v577 = vld [vmem:[#allocation9 + $0x70] sm:$0xff]
    %v578 = vld [vmem:[#allocation9 + $0x78] sm:$0xff]
    %v579 = vld [vmem:[#allocation9 + $0x80] sm:$0xff]
    %v580 = vld [vmem:[#allocation9 + $0x88] sm:$0xff]
    %v581 = vld [vmem:[#allocation9 + $0x90] sm:$0xff]
    %v582 = vld [vmem:[#allocation9 + $0x98] sm:$0xff]
    %v583 = vld [vmem:[#allocation9 + $0xa0] sm:$0xff]
    %v584 = vld [vmem:[#allocation9 + $0xa8] sm:$0xff]
    %v585 = vld [vmem:[#allocation9 + $0xb0] sm:$0xff]
    %v586 = vld [vmem:[#allocation9 + $0xb8] sm:$0xff]
    %v587 = vld [vmem:[#allocation9 + $0xc0] sm:$0xff]
    %v588 = vld [vmem:[#allocation9 + $0xc8] sm:$0xff]
    %v589 = vld [vmem:[#allocation9 + $0xd0] sm:$0xff]
    %v590 = vld [vmem:[#allocation9 + $0xd8] sm:$0xff]
    %v591 = vld [vmem:[#allocation9 + $0xe0] sm:$0xff]
    %v592 = vld [vmem:[#allocation9 + $0xe8] sm:$0xff]
    %v593 = vld [vmem:[#allocation9 + $0xf0] sm:$0xff]
    %v594 = vld [vmem:[#allocation9 + $0xf8] sm:$0xff]
    %v595 = vld [vmem:[#allocation9 + $0x100] sm:$0xff]
    %v596 = vld [vmem:[#allocation9 + $0x108] sm:$0xff]
    %v597 = vld [vmem:[#allocation9 + $0x110] sm:$0xff]
    %v598 = vld [vmem:[#allocation9 + $0x118] sm:$0xff]
    %v599 = vld [vmem:[#allocation9 + $0x120] sm:$0xff]
    %v600 = vld [vmem:[#allocation9 + $0x128] sm:$0xff]
    %v601 = vld [vmem:[#allocation9 + $0x130] sm:$0xff]
    %v602 = vld [vmem:[#allocation9 + $0x138] sm:$0xff]
    %v603 = vld [vmem:[#allocation9 + $0x140] sm:$0xff]
    %v604 = vld [vmem:[#allocation9 + $0x148] sm:$0xff]
    %v605 = vld [vmem:[#allocation9 + $0x150] sm:$0xff]
    %v606 = vld [vmem:[#allocation9 + $0x158] sm:$0xff]
    %v607 = vld [vmem:[#allocation9 + $0x160] sm:$0xff]
    %v608 = vld [vmem:[#allocation9 + $0x168] sm:$0xff]
    %v609 = vld [vmem:[#allocation9 + $0x170] sm:$0xff]
    %v610 = vld [vmem:[#allocation9 + $0x178] sm:$0xff]
    %v611 = vld [vmem:[#allocation9 + $0x180] sm:$0xff]
    %v612 = vld [vmem:[#allocation9 + $0x188] sm:$0xff]
    %v613 = vld [vmem:[#allocation9 + $0x190] sm:$0xff]
    %v614 = vld [vmem:[#allocation9 + $0x198] sm:$0xff]
    %v615 = vld [vmem:[#allocation9 + $0x1a0] sm:$0xff]
    %v616 = vld [vmem:[#allocation9 + $0x1a8] sm:$0xff]
    %v617 = vld [vmem:[#allocation9 + $0x1b0] sm:$0xff]
    %v618 = vld [vmem:[#allocation9 + $0x1b8] sm:$0xff]
    %v619 = vld [vmem:[#allocation9 + $0x1c0] sm:$0xff]
    %v620 = vld [vmem:[#allocation9 + $0x1c8] sm:$0xff]
    %v621 = vld [vmem:[#allocation9 + $0x1d0] sm:$0xff]
    %v622 = vld [vmem:[#allocation9 + $0x1d8] sm:$0xff]
    %v623 = vld [vmem:[#allocation9 + $0x1e0] sm:$0xff]
    %v624 = vld [vmem:[#allocation9 + $0x1e8] sm:$0xff]
    %v625 = vld [vmem:[#allocation9 + $0x1f0] sm:$0xff]
    %v626 = vld [vmem:[#allocation9 + $0x1f8] sm:$0xff]
    %627 = vmatpush.msra.mxu0 %v578
    %628 = vmatpush.msra.mxu0 %v577
    %629 = vmatpush.msra.mxu0 %v576
    %630 = vmatpush.msra.mxu0 %v575
    %631 = vmatpush.msra.mxu0 %v574
    %632 = vmatpush.msra.mxu0 %v573
    %633 = vmatpush.msra.mxu0 %v572
    %634 = vmatpush.msra.mxu0 %v571
    %635 = vmatpush.msra.mxu0 %v570
    %636 = vmatpush.msra.mxu0 %v569
    %637 = vmatpush.msra.mxu0 %v568
    %638 = vmatpush.msra.mxu0 %v567
    %639 = vmatpush.msra.mxu0 %v566
    %640 = vmatpush.msra.mxu0 %v565
    %641 = vmatpush.msra.mxu0 %v564
    %642 = vmatpush.msra.mxu0 %v563
    %643 = vmatmul.f32.gmra.mxu0 %v555
    %v644 = vpop.f32.mrf.mxu0
    %v645 = vadd.f32 0.0, %v644
    %646 = vmatmul.f32.gmra.mxu0 %v559
    %v647 = vpop.f32.mrf.mxu0
    %v648 = vadd.f32 0.0, %v647
    %649 = vdwg.mxu0
    %650 = vmatpush.msra.mxu0 %v594
    %651 = vmatpush.msra.mxu0 %v593
    %652 = vmatpush.msra.mxu0 %v592
    %653 = vmatpush.msra.mxu0 %v591
    %654 = vmatpush.msra.mxu0 %v590
    %655 = vmatpush.msra.mxu0 %v589
    %656 = vmatpush.msra.mxu0 %v588
    %657 = vmatpush.msra.mxu0 %v587
    %658 = vmatpush.msra.mxu0 %v586
    %659 = vmatpush.msra.mxu0 %v585
    %660 = vmatpush.msra.mxu0 %v584
    %661 = vmatpush.msra.mxu0 %v583
    %662 = vmatpush.msra.mxu0 %v582
    %663 = vmatpush.msra.mxu0 %v581
    %664 = vmatpush.msra.mxu0 %v580
    %665 = vmatpush.msra.mxu0 %v579
    %666 = vmatmul.f32.gmra.mxu0 %v556
    %v667 = vpop.f32.mrf.mxu0
    %v668 = vadd.f32 %v645, %v667
    %669 = vmatmul.f32.gmra.mxu0 %v560
    %v670 = vpop.f32.mrf.mxu0
    %v671 = vadd.f32 %v648, %v670
    %672 = vdwg.mxu0
    %673 = vmatpush.msra.mxu0 %v610
    %674 = vmatpush.msra.mxu0 %v609
    %675 = vmatpush.msra.mxu0 %v608
    %676 = vmatpush.msra.mxu0 %v607
    %677 = vmatpush.msra.mxu0 %v606
    %678 = vmatpush.msra.mxu0 %v605
    %679 = vmatpush.msra.mxu0 %v604
    %680 = vmatpush.msra.mxu0 %v603
    %681 = vmatpush.msra.mxu0 %v602
    %682 = vmatpush.msra.mxu0 %v601
    %683 = vmatpush.msra.mxu0 %v600
    %684 = vmatpush.msra.mxu0 %v599
    %685 = vmatpush.msra.mxu0 %v598
    %686 = vmatpush.msra.mxu0 %v597
    %687 = vmatpush.msra.mxu0 %v596
    %688 = vmatpush.msra.mxu0 %v595
    %689 = vmatmul.f32.gmra.mxu0 %v557
    %v690 = vpop.f32.mrf.mxu0
    %v691 = vadd.f32 %v668, %v690
    %692 = vmatmul.f32.gmra.mxu0 %v561
    %v693 = vpop.f32.mrf.mxu0
    %v694 = vadd.f32 %v671, %v693
    %695 = vdwg.mxu0
    %696 = vmatpush.msra.mxu0 %v626
    %697 = vmatpush.msra.mxu0 %v625
    %698 = vmatpush.msra.mxu0 %v624
    %699 = vmatpush.msra.mxu0 %v623
    %700 = vmatpush.msra.mxu0 %v622
    %701 = vmatpush.msra.mxu0 %v621
    %702 = vmatpush.msra.mxu0 %v620
    %703 = vmatpush.msra.mxu0 %v619
    %704 = vmatpush.msra.mxu0 %v618
    %705 = vmatpush.msra.mxu0 %v617
    %706 = vmatpush.msra.mxu0 %v616
    %707 = vmatpush.msra.mxu0 %v615
    %708 = vmatpush.msra.mxu0 %v614
    %709 = vmatpush.msra.mxu0 %v613
    %710 = vmatpush.msra.mxu0 %v612
    %711 = vmatpush.msra.mxu0 %v611
    %712 = vmatmul.f32.gmra.mxu0 %v558
    %v713 = vpop.f32.mrf.mxu0
    %v714 = vadd.f32 %v691, %v713
    %715 = vmatmul.f32.gmra.mxu0 %v562
    %v716 = vpop.f32.mrf.mxu0
    %v717 = vadd.f32 %v694, %v716
    %718 = vdwg.mxu0
    %p719 = scmp.eq.s32.totalorder 0, 0
    // Predicated region
    $region34: #{tpu_custom_call.1} parent=1 // pred_check
      %p720 = pneg %p719
    $region35: #{tpu_custom_call.1} parent=1 // pred_check_branch
      %722 = sbr.rel (%p720) target = $region37
    $region36: #{tpu_custom_call.1} parent=1 // pred_region
      %723 = vst [vmem:[#allocation2] sm:$0xff] %v714
      %724 = vst [vmem:[#allocation2 + $0x8] sm:$0xff] %v717
    $region37: #{tpu_custom_call.1} parent=1 // pred_fallthru
      _
    %p725 = scmp.gt.s32.totalorder 0, 0
    // Predicated region
    $region38: #{tpu_custom_call.1} parent=1 // pred_check
      %p726 = pneg %p725
    $region39: #{tpu_custom_call.1} parent=1 // pred_check_branch
      %728 = sbr.rel (%p726) target = $region41
    $region40: #{tpu_custom_call.1} parent=1 // pred_region
      %v729 = vld [vmem:[#allocation2] sm:$0xff]
      %v730 = vld [vmem:[#allocation2 + $0x8] sm:$0xff]
      %v731 = vadd.f32 %v729, %v714
      %v732 = vadd.f32 %v730, %v717
      %733 = vst [vmem:[#allocation2] sm:$0xff] %v731
      %734 = vst [vmem:[#allocation2 + $0x8] sm:$0xff] %v732
    $region41: #{tpu_custom_call.1} parent=1 // pred_fallthru
      _
    // Predicated region
    $region42: #{tpu_custom_call.1} parent=1 // pred_check
      %p735 = pneg %p719
    $region43: #{tpu_custom_call.1} parent=1 // pred_check_branch
      %737 = sbr.rel (%p735) target = $region45
    $region44: #{tpu_custom_call.1} parent=1 // pred_region
      %v738 = vld [vmem:[#allocation2] sm:$0xff]
      %v739 = vld [vmem:[#allocation2 + $0x8] sm:$0xff]
      %740 = vst [vmem:[#allocation11] sm:$0xff] %v738
      %741 = vst [vmem:[#allocation11 + $0x8] sm:$0xff] %v739
    $region45: #{tpu_custom_call.1} parent=1 // pred_fallthru
      _
    // Predicated region
    $region46: #{tpu_custom_call.1} parent=1 // pred_check
      _
    $region47: #{tpu_custom_call.1} parent=1 // pred_check_branch
      %743 = sbr.rel (0) target = $region49
    $region48: #{tpu_custom_call.1} parent=1 // pred_region
      %745 = vsyncadd [#allocation5], 0
      %s746 = sshll.u32 [#allocation11], 4
      %s747 = int_to_ptr.vmem [resolvable:$true] %s746
      %s748 = sshll.u32 %s4, 4
      %s749 = int_to_ptr.hbm [resolvable:$true] %s748
      %754 = dma.vmem_to_hbm [thread:$0]  %s747, 256, %s749, [#allocation5], 128, 128, 8
    $region49: #{tpu_custom_call.1} parent=1 // pred_fallthru
      _
    // Predicated region
    $region50: #{tpu_custom_call.1} parent=1 // pred_check
      _
    $region51: #{tpu_custom_call.1} parent=1 // pred_check_branch
      %756 = sbr.rel (0) target = $region53
    $region52: #{tpu_custom_call.1} parent=1 // pred_region
      %758 = dma.done [#allocation5], 256
    $region53: #{tpu_custom_call.1} parent=1 // pred_fallthru
      _
    %759 = vsyncpa [#allocation4], 1
    %760 = vsyncpa [#allocation7], 1
    %761 = vsyncpa [#allocation10], 1
    %762 = vsyncpa [#allocation5], 1

</llo_original>
